<compile_context>
chip_gen: v5e
topology: v5e:2x2
jax: 0.10.0
libtpu: 0.0.40
codegen_flags: <defaults>
</compile_context>

<pallas_src>
import functools

import jax
import jax.numpy as jnp
from jax import lax
from jax.experimental import pallas as pl
from jax.experimental.pallas import tpu as pltpu


# --------------------------------------------------------------------------------------------
# small helpers
# --------------------------------------------------------------------------------------------
def _round_up(x, m):
    return (x + m - 1) // m * m


@functools.lru_cache(maxsize=None)
def _device_kind():
    try:
        return jax.devices()[0].device_kind.lower()
    except Exception:
        return ""


@functools.lru_cache(maxsize=None)
def _vmem_limit_bytes():
    """Generation-aware VMEM limit: ~3/4 of physical (≈96 MiB on v5e/v6e, ≈48 MiB on v7x)."""
    try:
        cap = int(pltpu.get_tpu_info().vmem_capacity_bytes)
    except Exception:
        cap = 64 * 1024 * 1024  # conservative default = v7x per-TensorCore VMEM
    return max(16 * 1024 * 1024, min(3 * cap // 4, 100 * 1024 * 1024))


def _probe_copy_kernel(x_ref, o_ref):
    o_ref[...] = x_ref[...]


@functools.lru_cache(maxsize=None)
def _buffered1_supported():
    """Whether BlockSpec(pipeline_mode=pl.Buffered(1)) (single-buffered resident input) works."""
    if not hasattr(pl, "Buffered"):
        return False
    try:
        x = jnp.arange(8 * 128, dtype=jnp.float32).reshape(8, 128)
        fn = pl.pallas_call(
            _probe_copy_kernel,
            out_shape=jax.ShapeDtypeStruct((16, 128), jnp.float32),
            grid=(2,),
            in_specs=[pl.BlockSpec((8, 128), lambda i: (0, 0), pipeline_mode=pl.Buffered(1))],
            out_specs=pl.BlockSpec((8, 128), lambda i: (i, 0)),
        )
        out = jax.block_until_ready(fn(x))
        return bool(jnp.allclose(out[:8], x)) and bool(jnp.allclose(out[8:], x))
    except Exception:
        return False


def _choose_row_tile(Ho, Wo, C, KK, Cout, itemsize, fixed_bytes, budget_bytes, lane_pref):
    """Largest lane-legal divisor TH of Ho whose per-tile VMEM footprint fits the budget.

    Lane-legal: the output block's last dim TH*Wo is a multiple of 128 or TH == Ho (full extent).
    Prefers 256-alignment (lane_pref) on v6e/v7x so the final MXU pass is not half filled.
    """
    Cout_s = _round_up(Cout, 8)
    KKC_pad = _round_up(KK * C, 128)
    C_pad = _round_up(C, 128)

    def tile_bytes(th):
        rows = th * Wo
        rows_lane = _round_up(rows, 128)
        rows_sub = _round_up(rows, 8)
        out_blk = 2 * Cout_s * rows_lane * itemsize              # double-buffered output tile
        patches = 2 * rows_sub * max(KKC_pad, C_pad) * itemsize  # tap staging (+ concat copy)
        res = Cout_s * rows_lane * 4                             # f32 result / accumulator
        return out_blk + patches + res

    divisors = [d for d in range(1, Ho + 1) if Ho % d == 0]
    legal = [d for d in divisors if d == Ho or (d * Wo) % 128 == 0]
    fitting = [d for d in legal if fixed_bytes + tile_bytes(d) <= budget_bytes]
    if not fitting:
        # TODO(synk): ragged / halo-streamed row tiles for extreme shapes; fall back to the
        # smallest-footprint legal tile (may still spill, but never picks a worse tile).
        return min(legal, key=tile_bytes)
    pref = [d for d in fitting if d == Ho or (d * Wo) % lane_pref == 0]
    return max(pref) if pref else max(fitting)


# --------------------------------------------------------------------------------------------
# kernel
# --------------------------------------------------------------------------------------------
def _downsample_kernel(x_ref, w_ref, out_ref, *, TH, Wo, C, k, Cout, per_tap):
    # x_ref  : (1, Hh, 2, Wh, 2C)  phase-split padded image, resident for the whole batch element
    #          x_ref[0, hh, rp, wh, cp*C + c] == x_padded[2*hh + rp, 2*wh + cp, c]
    # w_ref  : fused depthwise*pointwise weights:
    #          per_tap -> (k*k, Cout, C); fused -> (Cout, k*k*C)
    # out_ref: (1, Cout, TH*Wo)    channel-major output tile (flattened spatial on the lane dim)
    r = pl.program_id(1)
    row0 = r * TH

    def tap(kh, kw):
        # stride-2 tap as a UNIT-STRIDE window of the phase-split image -> (TH, Wo, C)
        c0 = (kw % 2) * C
        return x_ref[0,
                     pl.ds(row0 + kh // 2, TH),   # output rows of this tile (+ row halo)
                     kh % 2,                       # row phase
                     kw // 2: kw // 2 + Wo,        # output cols (+ col halo), unit stride
                     c0: c0 + C]                   # column phase selects a channel half

    if per_tap:
        # k*k small contractions (K = C) accumulated in f32: no lane-concat of a patch matrix,
        # so no extra per-tile VMEM copy / XLU shuffle (preferred on v5e).
        acc = jnp.zeros((Cout, TH * Wo), jnp.float32)
        for kh in range(k):
            for kw in range(k):
                t = kh * k + kw
                acc = acc + lax.dot_general(
                    w_ref[t], tap(kh, kw).reshape(TH * Wo, C),
                    dimension_numbers=(((1,), (1,)), ((), ())),
                    preferred_element_type=jnp.float32)
        res_t = acc
    else:
        # Single fused MXU contraction (depthwise + pointwise folded into K = k*k*C).
        # TODO(synk): when Wo % 8 != 0 (f32) this flatten materializes an extra copy per tile.
        taps = [tap(kh, kw) for kh in range(k) for kw in range(k)]
        patches = jnp.concatenate(taps, axis=-1).reshape(TH * Wo, k * k * C)
        res_t = lax.dot_general(
            w_ref[...], patches,
            dimension_numbers=(((1,), (1,)), ((), ())),
            preferred_element_type=jnp.float32)      # (Cout, TH*Wo), channel-major (NT form)

    out_ref[0] = res_t.astype(out_ref.dtype)


# --------------------------------------------------------------------------------------------
# wrapper
# --------------------------------------------------------------------------------------------
def _downsampling_conv_impl(x_nchw, w_dw, w_pw, *, kernel_size, matmul_mode):
    N, C, H, W = x_nchw.shape
    k = int(kernel_size)
    pad = (k - 1) // 2
    Ho = (H + 2 * pad - k) // 2 + 1
    Wo = (W + 2 * pad - k) // 2 + 1
    KK = k * k
    Cout = w_pw.shape[0]
    dtype = x_nchw.dtype
    itemsize = jnp.dtype(dtype).itemsize

    # Phase-split geometry: padded index 2*o + t maps to (phase t % 2, position o + t // 2).
    Hh = Ho + (k - 1) // 2
    Wh = Wo + (k - 1) // 2
    HP, WP = 2 * Hh, 2 * Wh

    # ---- layout prep: under jit the transpose + pad + reshape lower to ONE producer fusion
    # writing x5 once (the activation is written ~1x and read ~1x by the kernel). ----
    x_nhwc = jnp.transpose(x_nchw, (0, 2, 3, 1))                          # (N, H, W, C)
    x_padded = jnp.pad(x_nhwc, ((0, 0),
                                (pad, max(0, HP - pad - H)),
                                (pad, max(0, WP - pad - W)),
                                (0, 0)))[:, :HP, :WP, :]                  # (N, HP, WP, C)
    x5 = x_padded.reshape(N, Hh, 2, Wh, 2 * C)                            # free phase-split reshape
    # TODO(synk): when 2*C < 128 the lane dim of x5 is padded to 128 in VMEM (up to 16x waste at
    # C=4); such configs would prefer a width-major layout or channel padding upstream.

    # ---- fused weights in f32, cast once to the MXU input dtype (bf16-safe rounding) ----
    wdw_t = jnp.transpose(w_dw[:, 0, :, :].astype(jnp.float32), (1, 2, 0)).reshape(KK, C)  # (KK,C)
    wpw_t = w_pw[:, :, 0, 0].astype(jnp.float32)                                           # (Cout,C)
    w_eff = wpw_t[:, None, :] * wdw_t[None, :, :]                                          # (Cout,KK,C)

    # ---- matmul formulation (per generation, overridable) ----
    assert matmul_mode in ("auto", "fused", "per_tap"), matmul_mode
    kind = _device_kind()
    is_v5 = "v5" in kind
    per_tap = (matmul_mode == "per_tap") or (matmul_mode == "auto" and is_v5)
    if per_tap:
        w_arg = jnp.transpose(w_eff, (1, 0, 2)).astype(dtype)              # (KK, Cout, C)
        w_spec = pl.BlockSpec((KK, Cout, C), lambda n, r: (0, 0, 0))
        w_vmem = KK * _round_up(Cout, 8) * _round_up(C, 128) * itemsize
    else:
        w_arg = w_eff.reshape(Cout, KK * C).astype(dtype)                  # (Cout, KK*C)
        w_spec = pl.BlockSpec((Cout, KK * C), lambda n, r: (0, 0))
        w_vmem = _round_up(Cout, 8) * _round_up(KK * C, 128) * itemsize

    # ---- generation-aware VMEM budgeting & row-tile selection ----
    vmem_limit = _vmem_limit_bytes()
    single_buffer_img = _buffered1_supported()
    img_bufs = 1 if single_buffer_img else 2
    img_vmem = Hh * 2 * _round_up(Wh, 8) * _round_up(2 * C, 128) * itemsize
    fixed_vmem = img_bufs * img_vmem + 2 * w_vmem
    budget = vmem_limit - (4 << 20)                 # headroom for compiler-internal scratch
    lane_pref = 128 if is_v5 else 256               # v6e/v7x MXUs are 256 wide
    TH = _choose_row_tile(Ho, Wo, C, KK, Cout, itemsize, fixed_vmem, budget, lane_pref)
    n_row_tiles = Ho // TH
    # TODO(synk): if one batch element's phase-split image does not fit VMEM even single-buffered
    # (huge H*W*C; threshold is half on v7x), switch to halo-aware manual DMA of (TH + k//2)-row
    # windows (memory_space=pl.ANY + pltpu.make_async_copy into a 2-slot VMEM scratch).

    img_block = (1, Hh, 2, Wh, 2 * C)
    img_index = lambda n, r: (n, 0, 0, 0, 0)        # ignores r -> resident across row tiles
    if single_buffer_img:
        # Only re-fetched on batch change, so a single buffer halves its VMEM at ~zero perf cost.
        img_spec = pl.BlockSpec(img_block, img_index, pipeline_mode=pl.Buffered(1))
    else:
        img_spec = pl.BlockSpec(img_block, img_index)

    # Megacore: shard the batch axis when there is one; never split row tiles of the same image
    # across cores (each core would DMA the entire image, doubling HBM traffic and VMEM pressure).
    dims = ("parallel", "arbitrary") if N >= 2 else ("arbitrary", "parallel")

    cost = pl.CostEstimate(
        flops=2 * N * Ho * Wo * Cout * KK * C,
        transcendentals=0,
        bytes_accessed=x5.size * itemsize + w_arg.size * itemsize + N * Cout * Ho * Wo * itemsize,
    )

    kernel = functools.partial(_downsample_kernel, TH=TH, Wo=Wo, C=C, k=k, Cout=Cout,
                               per_tap=per_tap)

    out_flat = pl.pallas_call(
        kernel,
        out_shape=jax.ShapeDtypeStruct((N, Cout, Ho * Wo), dtype),
        grid=(N, n_row_tiles),
        in_specs=[img_spec, w_spec],
        out_specs=pl.BlockSpec((1, Cout, TH * Wo), lambda n, r: (n, 0, r)),
        compiler_params=pltpu.CompilerParams(
            dimension_semantics=dims,
            vmem_limit_bytes=int(vmem_limit)),
        cost_estimate=cost,
    )(x5, w_arg)

    # Output is already channel-major (N, C, HW) — only a free reshape back to (N, Cout, Ho, Wo).
    return out_flat.reshape(N, Cout, Ho, Wo)


_jit_impl = jax.jit(_downsampling_conv_impl, static_argnames=("kernel_size", "matmul_mode"))


def downsampling_conv_pallas(x_nchw, w_dw, w_pw, kernel_size, matmul_mode="auto"):
    """DownsamplingConv.forward (separable=True, bias=False): depthwise stride-2 conv + 1x1 conv.

    x_nchw : (N, C, H, W)
    w_dw   : (C, 1, k, k)     depthwise weight (PyTorch layout, groups=C)
    w_pw   : (Cout, C, 1, 1)  pointwise 1x1 weight (PyTorch layout)
    returns: (N, Cout, Ho, Wo)
    """
    # TODO(synk): non-separable branch (plain strided conv) and bias=True are not implemented
    # (the module's defaults are separable=True, bias=False).
    return _jit_impl(x_nchw, w_dw, w_pw, kernel_size=int(kernel_size),
                     matmul_mode=str(matmul_mode))


# --------------------------------------------------------------------------------------------
# reference & self-test
# --------------------------------------------------------------------------------------------
def _reference(x_nchw, w_dw, w_pw, kernel_size):
    pad = (kernel_size - 1) // 2
    C = x_nchw.shape[1]
    dn = ("NCHW", "OIHW", "NCHW")
    dw = lax.conv_general_dilated(
        x_nchw, w_dw, window_strides=(2, 2), padding=[(pad, pad), (pad, pad)],
        dimension_numbers=dn, feature_group_count=C)
    return lax.conv_general_dilated(
        dw, w_pw, window_strides=(1, 1), padding=[(0, 0), (0, 0)],
        dimension_numbers=dn)


if __name__ == "__main__":
    master = jax.random.PRNGKey(0)

    def run_case(N, Cin, H, W, Cout, ksize, mode, key):
        k_x, k_dw, k_pw = jax.random.split(key, 3)
        x = jax.random.normal(k_x, (N, Cin, H, W), dtype=jnp.float32)
        # deterministic synthetic weights (kaiming-ish scale); bias=False in the module
        w_dw = jax.random.normal(k_dw, (Cin, 1, ksize, ksize), dtype=jnp.float32) * (1.0 / ksize)
        w_pw = jax.random.normal(k_pw, (Cout, Cin, 1, 1), dtype=jnp.float32) * (1.0 / (Cin ** 0.5))
        out = jax.block_until_ready(downsampling_conv_pallas(x, w_dw, w_pw, ksize,
                                                             matmul_mode=mode))
        ref = _reference(x, w_dw, w_pw, ksize)
        assert out.shape == ref.shape, (mode, out.shape, ref.shape)
        assert jnp.allclose(out, ref, atol=5e-4, rtol=5e-4), \
            f"mismatch vs lax conv reference (mode={mode}, k={ksize})"

    keys = jax.random.split(master, 4)
    # Primary shape from the module spec; exercise BOTH matmul formulations explicitly so the
    # v5e (per-tap) and v6e/v7x (fused-K) paths are both validated regardless of the host chip.
    run_case(2, 4, 16, 16, 8, 3, "auto", keys[0])
    run_case(2, 4, 16, 16, 8, 3, "fused", keys[1])
    run_case(2, 4, 16, 16, 8, 3, "per_tap", keys[2])
    # N=1 (row-tile-parallel branch), k=5, and a width whose Wo is not a multiple of 8.
    run_case(1, 4, 16, 12, 8, 5, "auto", keys[3])

    print("KERNEL_OK")
</pallas_src>

<mosaic_0001>
module attributes {stable_mosaic.version = 11 : i64} {
  func.func @_downsample_kernel(%arg0: i32, %arg1: i32, %arg2: memref<1x9x2x9x8xf32, #tpu.memory_space<vmem>>, %arg3: memref<8x36xf32, #tpu.memory_space<vmem>>, %arg4: memref<1x8x64xf32, #tpu.memory_space<vmem>>) attributes {dimension_semantics = [#tpu.dimension_semantics<parallel>, #tpu.dimension_semantics<arbitrary>], iteration_bounds = array<i64: 2, 1>, scalar_prefetch = 0 : i64, scratch_operands = 0 : i64, tpu.core_type = #tpu.core_type<tc>, window_params = [{transform_indices = @transform_0, window_bounds = array<i64: 1, 9, 2, 9, 8>}, {pipeline_mode = #tpu.pipeline_mode<synchronous>, transform_indices = @transform_1, window_bounds = array<i64: 8, 36>}, {transform_indices = @transform_2, window_bounds = array<i64: 1, 8, 64>}]} {
    %c8_i32 = arith.constant 8 : i32
    %0 = arith.muli %arg1, %c8_i32 : i32
    %c0_i32 = arith.constant 0 : i32
    %1 = arith.addi %0, %c0_i32 : i32
    %c0 = arith.constant 0 : index
    %2 = arith.index_cast %1 : i32 to index
    %c0_0 = arith.constant 0 : index
    %c0_1 = arith.constant 0 : index
    %c0_2 = arith.constant 0 : index
    %3 = vector.load %arg2[%c0, %2, %c0_0, %c0_1, %c0_2] : memref<1x9x2x9x8xf32, #tpu.memory_space<vmem>>, vector<1x8x1x8x4xf32>
    %4 = vector.shape_cast %3 : vector<1x8x1x8x4xf32> to vector<8x8x4xf32>
    %c0_i32_3 = arith.constant 0 : i32
    %5 = arith.addi %0, %c0_i32_3 : i32
    %c0_4 = arith.constant 0 : index
    %6 = arith.index_cast %5 : i32 to index
    %c0_5 = arith.constant 0 : index
    %c0_6 = arith.constant 0 : index
    %c4 = arith.constant 4 : index
    %7 = vector.load %arg2[%c0_4, %6, %c0_5, %c0_6, %c4] : memref<1x9x2x9x8xf32, #tpu.memory_space<vmem>>, vector<1x8x1x8x4xf32>
    %8 = vector.shape_cast %7 : vector<1x8x1x8x4xf32> to vector<8x8x4xf32>
    %c0_i32_7 = arith.constant 0 : i32
    %9 = arith.addi %0, %c0_i32_7 : i32
    %c0_8 = arith.constant 0 : index
    %10 = arith.index_cast %9 : i32 to index
    %c0_9 = arith.constant 0 : index
    %c1 = arith.constant 1 : index
    %c0_10 = arith.constant 0 : index
    %11 = vector.load %arg2[%c0_8, %10, %c0_9, %c1, %c0_10] : memref<1x9x2x9x8xf32, #tpu.memory_space<vmem>>, vector<1x8x1x8x4xf32>
    %12 = vector.shape_cast %11 : vector<1x8x1x8x4xf32> to vector<8x8x4xf32>
    %c0_i32_11 = arith.constant 0 : i32
    %13 = arith.addi %0, %c0_i32_11 : i32
    %c0_12 = arith.constant 0 : index
    %14 = arith.index_cast %13 : i32 to index
    %c1_13 = arith.constant 1 : index
    %c0_14 = arith.constant 0 : index
    %c0_15 = arith.constant 0 : index
    %15 = vector.load %arg2[%c0_12, %14, %c1_13, %c0_14, %c0_15] : memref<1x9x2x9x8xf32, #tpu.memory_space<vmem>>, vector<1x8x1x8x4xf32>
    %16 = vector.shape_cast %15 : vector<1x8x1x8x4xf32> to vector<8x8x4xf32>
    %c0_i32_16 = arith.constant 0 : i32
    %17 = arith.addi %0, %c0_i32_16 : i32
    %c0_17 = arith.constant 0 : index
    %18 = arith.index_cast %17 : i32 to index
    %c1_18 = arith.constant 1 : index
    %c0_19 = arith.constant 0 : index
    %c4_20 = arith.constant 4 : index
    %19 = vector.load %arg2[%c0_17, %18, %c1_18, %c0_19, %c4_20] : memref<1x9x2x9x8xf32, #tpu.memory_space<vmem>>, vector<1x8x1x8x4xf32>
    %20 = vector.shape_cast %19 : vector<1x8x1x8x4xf32> to vector<8x8x4xf32>
    %c0_i32_21 = arith.constant 0 : i32
    %21 = arith.addi %0, %c0_i32_21 : i32
    %c0_22 = arith.constant 0 : index
    %22 = arith.index_cast %21 : i32 to index
    %c1_23 = arith.constant 1 : index
    %c1_24 = arith.constant 1 : index
    %c0_25 = arith.constant 0 : index
    %23 = vector.load %arg2[%c0_22, %22, %c1_23, %c1_24, %c0_25] : memref<1x9x2x9x8xf32, #tpu.memory_space<vmem>>, vector<1x8x1x8x4xf32>
    %24 = vector.shape_cast %23 : vector<1x8x1x8x4xf32> to vector<8x8x4xf32>
    %c1_i32 = arith.constant 1 : i32
    %25 = arith.addi %0, %c1_i32 : i32
    %c0_26 = arith.constant 0 : index
    %26 = arith.index_cast %25 : i32 to index
    %c0_27 = arith.constant 0 : index
    %c0_28 = arith.constant 0 : index
    %c0_29 = arith.constant 0 : index
    %27 = vector.load %arg2[%c0_26, %26, %c0_27, %c0_28, %c0_29] : memref<1x9x2x9x8xf32, #tpu.memory_space<vmem>>, vector<1x8x1x8x4xf32>
    %28 = vector.shape_cast %27 : vector<1x8x1x8x4xf32> to vector<8x8x4xf32>
    %c1_i32_30 = arith.constant 1 : i32
    %29 = arith.addi %0, %c1_i32_30 : i32
    %c0_31 = arith.constant 0 : index
    %30 = arith.index_cast %29 : i32 to index
    %c0_32 = arith.constant 0 : index
    %c0_33 = arith.constant 0 : index
    %c4_34 = arith.constant 4 : index
    %31 = vector.load %arg2[%c0_31, %30, %c0_32, %c0_33, %c4_34] : memref<1x9x2x9x8xf32, #tpu.memory_space<vmem>>, vector<1x8x1x8x4xf32>
    %32 = vector.shape_cast %31 : vector<1x8x1x8x4xf32> to vector<8x8x4xf32>
    %c1_i32_35 = arith.constant 1 : i32
    %33 = arith.addi %0, %c1_i32_35 : i32
    %c0_36 = arith.constant 0 : index
    %34 = arith.index_cast %33 : i32 to index
    %c0_37 = arith.constant 0 : index
    %c1_38 = arith.constant 1 : index
    %c0_39 = arith.constant 0 : index
    %35 = vector.load %arg2[%c0_36, %34, %c0_37, %c1_38, %c0_39] : memref<1x9x2x9x8xf32, #tpu.memory_space<vmem>>, vector<1x8x1x8x4xf32>
    %36 = vector.shape_cast %35 : vector<1x8x1x8x4xf32> to vector<8x8x4xf32>
    %37 = tpu.concatenate %4, %8, %12, %16, %20, %24, %28, %32, %36 in 2 : vector<8x8x4xf32>, vector<8x8x4xf32>, vector<8x8x4xf32>, vector<8x8x4xf32>, vector<8x8x4xf32>, vector<8x8x4xf32>, vector<8x8x4xf32>, vector<8x8x4xf32>, vector<8x8x4xf32> -> vector<8x8x36xf32>
    %38 = vector.shape_cast %37 : vector<8x8x36xf32> to vector<64x36xf32>
    %c0_40 = arith.constant 0 : index
    %c0_41 = arith.constant 0 : index
    %39 = vector.load %arg3[%c0_40, %c0_41] : memref<8x36xf32, #tpu.memory_space<vmem>>, vector<8x36xf32>
    %cst = arith.constant dense<0.000000e+00> : vector<8x64xf32>
    %40 = tpu.matmul %39, %38, %cst {dimension_numbers = #tpu.dot_dimension_numbers<[1], [1], [0], [0], [0, 0, 1, 0], [], []>} : vector<8x36xf32>, vector<64x36xf32>, vector<8x64xf32> -> vector<8x64xf32>
    %c0_42 = arith.constant 0 : index
    %c0_43 = arith.constant 0 : index
    %c0_44 = arith.constant 0 : index
    %41 = vector.load %arg4[%c0_42, %c0_43, %c0_44] : memref<1x8x64xf32, #tpu.memory_space<vmem>>, vector<1x8x64xf32>
    %42 = vector.shape_cast %41 : vector<1x8x64xf32> to vector<8x64xf32>
    %43 = vector.shape_cast %40 : vector<8x64xf32> to vector<1x8x64xf32>
    tpu.vector_store %arg4[%c0_42, %c0_43, %c0_44], %43 {strides = array<i32>} : memref<1x8x64xf32, #tpu.memory_space<vmem>>, vector<1x8x64xf32>,
    return
  }
  func.func @transform_0(%arg0: i32, %arg1: i32) -> (i32, i32, i32, i32, i32) {
    %c0_i32 = arith.constant 0 : i32
    %c0_i32_0 = arith.constant 0 : i32
    %c0_i32_1 = arith.constant 0 : i32
    %c0_i32_2 = arith.constant 0 : i32
    %c0_i32_3 = arith.constant 0 : i32
    return %arg0, %c0_i32, %c0_i32_0, %c0_i32_1, %c0_i32_2 : i32, i32, i32, i32, i32
  }
  func.func @transform_1(%arg0: i32, %arg1: i32) -> (i32, i32) {
    %c0_i32 = arith.constant 0 : i32
    %c0_i32_0 = arith.constant 0 : i32
    %c0_i32_1 = arith.constant 0 : i32
    return %c0_i32, %c0_i32_0 : i32, i32
  }
  func.func @transform_2(%arg0: i32, %arg1: i32) -> (i32, i32, i32) {
    %c0_i32 = arith.constant 0 : i32
    %c0_i32_0 = arith.constant 0 : i32
    return %arg0, %c0_i32, %arg1 : i32, i32, i32
  }
}

</mosaic_0001>

<llo_original>
// kernel: _downsampling_conv_impl.1
$region0: #{_downsampling_conv_impl.1}
  #allocation0 [shape = 'u32[]', space=smem, size = 0x4, offset = 0x4, fixed_abs, tag = 'smem constant byte address 0x4 - core index']
  #allocation1 [shape = 'u32[72,128]{1,0:T(1,128)}', space=vmem, size = 0x9000, scoped, tag = 'internal scratch']
  %s0 = inlined_call_operand.vmem [shape: f32[2,9,2,9,8], index: 0, kind: input, shape index: {}]
  %s1 = inlined_call_operand.vmem [shape: f32[8,36], index: 1, kind: input, shape index: {}]
  %s2 = inlined_call_operand.vmem [shape: f32[2,8,64], index: 2, kind: output, shape index: {}]
  %s3 = sld [smem:[#allocation0]]
  $region41: #{_downsampling_conv_impl.1} parent=0
    _
  %s5 = ssub.s32 1, %s3
  %s6 = scalar_select 0, %s5, %s3
  loop: start=0, step=1, limit=4
  $region2: #{_downsampling_conv_impl.1} parent=0 // loop_pre_header
    _
  $region3: #{_downsampling_conv_impl.1} parent=0 // loop_header
    %s8 = sphi 0, %s12
    %p9 = scmp.ge.s32.totalorder %s8, 4
    %s15 = sphi 0, %s27
    %s16 = sphi 0, %s23
    %s17 = sphi 0, %s15
    %s18 = sphi 0, %s16
    %s19 = sphi 0, %s17
    %s20 = sphi 0, %s18
    %s30 = sphi 0, %s32
    %s33 = sphi 0, %s30
    %s34 = sphi 0, %s33
    %s50 = sphi 0, %s34
    %s54 = sphi 0, %s54
    %s56 = sphi 0, %s54
    %s57 = sphi 0, %s56
    %s71 = sphi 0, %s57
    %s79 = sphi 0, %s81
    %s82 = sphi 0, %s79
    %s83 = sphi 0, %s82
    %s99 = sphi 0, %s83
  $region4: #{_downsampling_conv_impl.1} parent=0 // loop_header_branch
    %11 = sbr.rel (%p9) target = $region8
  $region5: #{_downsampling_conv_impl.1} parent=0 // loop_body
    %s13 = ssub.s32 %s8, 1
    %s14 = ssub.s32 %s8, 2
    %s21 = sadd.s32 1, %s16
    %p22 = scmp.ge.s32.totalorder %s21, 1
    %s23 = scalar_select %p22, 0, %s21
    %s24 = sadd.s32 1, %s15
    %s25 = scalar_select %p22, %s24, %s15
    %p26 = scmp.ge.s32.totalorder %s25, 2
    %s27 = scalar_select %p26, 0, %s25
    %s28 = ssub.s32 %s15, %s27
    %p29 = scmp.eq.s32.totalorder %s28, 0
    %s31 = sadd.s32 %s30, 1
    %s32 = scalar_select %p29, %s30, %s31
    %p35 = pneg %p29
    %p36 = scmp.eq.s32.totalorder %s8, 1
    %p37 = por %p35, %p36
    %p38 = scmp.ne.s32.totalorder %s30, %s33
    %p39 = scmp.eq.s32.totalorder %s8, 0
    %p40 = por %p38, %p39
    %p41 = scmp.ne.s32.totalorder %s30, %s33
    %p42 = scmp.eq.s32.totalorder %s13, 1
    %p43 = por %p41, %p42
    %p44 = scmp.ne.s32.totalorder %s33, %s34
    %p45 = scmp.eq.s32.totalorder %s13, 0
    %p46 = por %p44, %p45
    %p47 = scmp.ne.s32.totalorder %s33, %s34
    %p48 = scmp.eq.s32.totalorder %s14, 1
    %p49 = por %p47, %p48
    %p51 = scmp.ne.s32.totalorder %s34, %s50
    %p52 = scmp.eq.s32.totalorder %s14, 0
    %p53 = por %p51, %p52
    %s55 = sadd.s32 %s54, 1
    %p58 = scmp.eq.s32.totalorder %s8, 1
    %p59 = scmp.ne.s32.totalorder %s54, %s56
    %p60 = scmp.eq.s32.totalorder %s8, 0
    %p61 = por %p59, %p60
    %p62 = scmp.ne.s32.totalorder %s54, %s56
    %p63 = scmp.eq.s32.totalorder %s13, 1
    %p64 = por %p62, %p63
    %p65 = scmp.ne.s32.totalorder %s56, %s57
    %p66 = scmp.eq.s32.totalorder %s13, 0
    %p67 = por %p65, %p66
    %p68 = scmp.ne.s32.totalorder %s56, %s57
    %p69 = scmp.eq.s32.totalorder %s14, 1
    %p70 = por %p68, %p69
    %p72 = scmp.ne.s32.totalorder %s57, %s71
    %p73 = scmp.eq.s32.totalorder %s14, 0
    %p74 = por %p72, %p73
    %s75 = ssub.s32 %s15, %s27
    %s76 = ssub.s32 %s16, %s23
    %s77 = sor.u32 %s75, %s76
    %p78 = scmp.eq.s32.totalorder %s77, 0
    %s80 = sadd.s32 %s79, 1
    %s81 = scalar_select %p78, %s79, %s80
    %p84 = pneg %p78
    %p85 = scmp.eq.s32.totalorder %s8, 1
    %p86 = por %p84, %p85
    %p87 = scmp.ne.s32.totalorder %s79, %s82
    %p88 = scmp.eq.s32.totalorder %s8, 0
    %p89 = por %p87, %p88
    %p90 = scmp.ne.s32.totalorder %s79, %s82
    %p91 = scmp.eq.s32.totalorder %s13, 1
    %p92 = por %p90, %p91
    %p93 = scmp.ne.s32.totalorder %s82, %s83
    %p94 = scmp.eq.s32.totalorder %s13, 0
    %p95 = por %p93, %p94
    %p96 = scmp.ne.s32.totalorder %s82, %s83
    %p97 = scmp.eq.s32.totalorder %s14, 1
    %p98 = por %p96, %p97
    %p100 = scmp.ne.s32.totalorder %s83, %s99
    %p101 = scmp.eq.s32.totalorder %s14, 0
    %p102 = por %p100, %p101
    %p103 = scmp.le.s32.totalorder 1, %s8
    %p104 = scmp.lt.s32.totalorder %s8, 3
    %p105 = pnand %p103, %p104
    %p106 = pneg %p105
    // Predicated region
    $region9: #{_downsampling_conv_impl.1} parent=5 // pred_check
      _
    $region10: #{_downsampling_conv_impl.1} parent=5 // pred_check_branch
      %108 = sbr.rel (%p105) target = $region12
    $region11: #{_downsampling_conv_impl.1} parent=5 // pred_region
      %s109 = ssub.s32 %s8, 1
      // Predicated region
      $region13: #{_downsampling_conv_impl.1} parent=11 // pred_check
        %p110 = pneg %p67
      $region14: #{_downsampling_conv_impl.1} parent=11 // pred_check_branch
        %112 = sbr.rel (%p110) target = $region16
      $region15: #{_downsampling_conv_impl.1} parent=11 // pred_region
        _
      $region16: #{_downsampling_conv_impl.1} parent=11 // pred_fallthru
        _
    $region12: #{_downsampling_conv_impl.1} parent=5 // pred_fallthru
      _
    %p113 = scmp.lt.s32.totalorder %s8, 2
    // Predicated region
    $region17: #{_downsampling_conv_impl.1} parent=5 // pred_check
      %p114 = pneg %p113
    $region18: #{_downsampling_conv_impl.1} parent=5 // pred_check_branch
      %116 = sbr.rel (%p114) target = $region20
    $region19: #{_downsampling_conv_impl.1} parent=5 // pred_region
      // Predicated region
      $region21: #{_downsampling_conv_impl.1} parent=19 // pred_check
        %p117 = pneg %p40
      $region22: #{_downsampling_conv_impl.1} parent=19 // pred_check_branch
        %119 = sbr.rel (%p117) target = $region24
      $region23: #{_downsampling_conv_impl.1} parent=19 // pred_region
        %p120 = scmp.lt.s32.totalorder %s15, 1
        %s121 = scalar_select %p120, %s15, 1
        %s122 = smul.addr %s121, 36
        %s123 = smul.addr %s122, 8
        %s124 = scalar_lea.vmem %s0, %s123
      $region24: #{_downsampling_conv_impl.1} parent=19 // pred_fallthru
        _
    $region20: #{_downsampling_conv_impl.1} parent=5 // pred_fallthru
      _
    %p125 = scmp.le.s32.totalorder 1, %s8
    %p126 = scmp.lt.s32.totalorder %s8, 3
    %p127 = pnand %p125, %p126
    %p128 = pneg %p127
    // Predicated region
    $region25: #{_downsampling_conv_impl.1} parent=5 // pred_check
      _
    $region26: #{_downsampling_conv_impl.1} parent=5 // pred_check_branch
      %130 = sbr.rel (%p127) target = $region28
    $region27: #{_downsampling_conv_impl.1} parent=5 // pred_region
      %s131 = ssub.s32 %s8, 1
      %p132 = scmp.lt.s32.totalorder %s17, 1
      %s133 = scalar_select %p132, %s17, 1
      %s134 = smul.addr %s133, 36
      %s135 = smul.addr %s134, 8
      %s136 = scalar_lea.vmem %s0, %s135
      %p137 = pneg %p46
      %p138 = pneg %p43
      %p139 = pneg %p67
      %p140 = pneg %p64
      %p141 = pneg %p95
      %p142 = pneg %p92
      %p143 = scmp.lt.s32.totalorder %s17, 1
      %s144 = scalar_select %p143, %s17, 1
      %p145 = scmp.lt.s32.totalorder %s18, 0
      %s146 = scalar_select %p145, %s18, 0
      %s147 = sadd.s32 %s146, %s144
      %s148 = smul.addr %s147, 8
      %s149 = scalar_lea.vmem %s2, %s148
      %p150 = scmp.lt.s32.totalorder %s17, 1
      %s151 = scalar_select %p150, %s17, 1
      %s152 = smul.addr %s151, 36
      %s153 = smul.addr %s152, 8
      %s154 = scalar_lea.vmem %s0, %s153
      %p155 = scmp.lt.s32.totalorder %s17, 1
      %s156 = scalar_select %p155, %s17, 1
      %p157 = scmp.lt.s32.totalorder %s18, 0
      %s158 = scalar_select %p157, %s18, 0
      %s159 = sadd.s32 %s158, %s156
      %s160 = smul.addr %s159, 8
      %s161 = scalar_lea.vmem %s2, %s160
      %s162 = smul.u32 %s18, 8
      %s163 = smul.u32 %s162, 32
      %s164 = scalar_lea.vmem %s154, %s163
      %v165 = vld [vmem:[%s164] sm:$0xff]
      %v166 = vld [vmem:[%s164 + $0x20] sm:$0xff]
      %v167 = vld [vmem:[%s164 + $0x40] sm:$0xff]
      %v168 = vld [vmem:[%s164 + $0x60] sm:$0xff]
      %v169 = vld [vmem:[%s164 + $0x80] sm:$0xff]
      %v170 = vld [vmem:[%s164 + $0xa0] sm:$0xff]
      %v171 = vld [vmem:[%s164 + $0xc0] sm:$0xff]
      %v172 = vld [vmem:[%s164 + $0xe0] sm:$0xff]
      %v173 = vld [vmem:[%s164 + $0x1] sm:$0xff]
      %v174 = vld [vmem:[%s164 + $0x21] sm:$0xff]
      %v175 = vld [vmem:[%s164 + $0x41] sm:$0xff]
      %v176 = vld [vmem:[%s164 + $0x61] sm:$0xff]
      %v177 = vld [vmem:[%s164 + $0x81] sm:$0xff]
      %v178 = vld [vmem:[%s164 + $0xa1] sm:$0xff]
      %v179 = vld [vmem:[%s164 + $0xc1] sm:$0xff]
      %v180 = vld [vmem:[%s164 + $0xe1] sm:$0xff]
      %s181 = sadd.s32 16, %s163
      %s182 = scalar_lea.vmem %s154, %s181
      %v183 = vld [vmem:[%s182] sm:$0xff]
      %v184 = vld [vmem:[%s182 + $0x20] sm:$0xff]
      %v185 = vld [vmem:[%s182 + $0x40] sm:$0xff]
      %v186 = vld [vmem:[%s182 + $0x60] sm:$0xff]
      %v187 = vld [vmem:[%s182 + $0x80] sm:$0xff]
      %v188 = vld [vmem:[%s182 + $0xa0] sm:$0xff]
      %v189 = vld [vmem:[%s182 + $0xc0] sm:$0xff]
      %v190 = vld [vmem:[%s182 + $0xe0] sm:$0xff]
      %v191 = vld [vmem:[%s182 + $0x1] sm:$0xff]
      %v192 = vld [vmem:[%s182 + $0x21] sm:$0xff]
      %v193 = vld [vmem:[%s182 + $0x41] sm:$0xff]
      %v194 = vld [vmem:[%s182 + $0x61] sm:$0xff]
      %v195 = vld [vmem:[%s182 + $0x81] sm:$0xff]
      %v196 = vld [vmem:[%s182 + $0xa1] sm:$0xff]
      %v197 = vld [vmem:[%s182 + $0xc1] sm:$0xff]
      %v198 = vld [vmem:[%s182 + $0xe1] sm:$0xff]
      %s199 = sadd.s32 %s162, 1
      %s200 = smul.u32 %s199, 32
      %s201 = scalar_lea.vmem %s154, %s200
      %v202 = vld [vmem:[%s201] sm:$0xff]
      %v203 = vld [vmem:[%s201 + $0x20] sm:$0xff]
      %v204 = vld [vmem:[%s201 + $0x40] sm:$0xff]
      %v205 = vld [vmem:[%s201 + $0x60] sm:$0xff]
      %v206 = vld [vmem:[%s201 + $0x80] sm:$0xff]
      %v207 = vld [vmem:[%s201 + $0xa0] sm:$0xff]
      %v208 = vld [vmem:[%s201 + $0xc0] sm:$0xff]
      %v209 = vld [vmem:[%s201 + $0xe0] sm:$0xff]
      %v210 = vld [vmem:[%s201 + $0x1] sm:$0xff]
      %v211 = vld [vmem:[%s201 + $0x21] sm:$0xff]
      %v212 = vld [vmem:[%s201 + $0x41] sm:$0xff]
      %v213 = vld [vmem:[%s201 + $0x61] sm:$0xff]
      %v214 = vld [vmem:[%s201 + $0x81] sm:$0xff]
      %v215 = vld [vmem:[%s201 + $0xa1] sm:$0xff]
      %v216 = vld [vmem:[%s201 + $0xc1] sm:$0xff]
      %v217 = vld [vmem:[%s201 + $0xe1] sm:$0xff]
      %226 = vrot.lane.b32.xlu0 %v173, 8
      %v227 = vpop.permute.xlu0 %226
      %228 = vrot.lane.b32.xlu0 %v174, 8
      %v229 = vpop.permute.xlu0 %228
      %230 = vrot.lane.b32.xlu0 %v175, 8
      %v231 = vpop.permute.xlu0 %230
      %232 = vrot.lane.b32.xlu0 %v176, 8
      %v233 = vpop.permute.xlu0 %232
      %234 = vrot.lane.b32.xlu0 %v177, 8
      %v235 = vpop.permute.xlu0 %234
      %236 = vrot.lane.b32.xlu0 %v178, 8
      %v237 = vpop.permute.xlu0 %236
      %238 = vrot.lane.b32.xlu0 %v179, 8
      %v239 = vpop.permute.xlu0 %238
      %240 = vrot.lane.b32.xlu0 %v180, 8
      %v241 = vpop.permute.xlu0 %240
      %258 = vrot.lane.b32.xlu0 %v183, 12
      %v259 = vpop.permute.xlu0 %258
      %260 = vrot.lane.b32.xlu0 %v184, 12
      %v261 = vpop.permute.xlu0 %260
      %262 = vrot.lane.b32.xlu0 %v185, 12
      %v263 = vpop.permute.xlu0 %262
      %264 = vrot.lane.b32.xlu0 %v186, 12
      %v265 = vpop.permute.xlu0 %264
      %266 = vrot.lane.b32.xlu0 %v187, 12
      %v267 = vpop.permute.xlu0 %266
      %268 = vrot.lane.b32.xlu0 %v188, 12
      %v269 = vpop.permute.xlu0 %268
      %270 = vrot.lane.b32.xlu0 %v189, 12
      %v271 = vpop.permute.xlu0 %270
      %272 = vrot.lane.b32.xlu0 %v190, 12
      %v273 = vpop.permute.xlu0 %272
      %290 = vrot.lane.b32.xlu0 %v191, 20
      %v291 = vpop.permute.xlu0 %290
      %292 = vrot.lane.b32.xlu0 %v192, 20
      %v293 = vpop.permute.xlu0 %292
      %294 = vrot.lane.b32.xlu0 %v193, 20
      %v295 = vpop.permute.xlu0 %294
      %296 = vrot.lane.b32.xlu0 %v194, 20
      %v297 = vpop.permute.xlu0 %296
      %298 = vrot.lane.b32.xlu0 %v195, 20
      %v299 = vpop.permute.xlu0 %298
      %300 = vrot.lane.b32.xlu0 %v196, 20
      %v301 = vpop.permute.xlu0 %300
      %302 = vrot.lane.b32.xlu0 %v197, 20
      %v303 = vpop.permute.xlu0 %302
      %304 = vrot.lane.b32.xlu0 %v198, 20
      %v305 = vpop.permute.xlu0 %304
      %322 = vrot.lane.b32.xlu0 %v202, 24
      %v323 = vpop.permute.xlu0 %322
      %324 = vrot.lane.b32.xlu0 %v203, 24
      %v325 = vpop.permute.xlu0 %324
      %326 = vrot.lane.b32.xlu0 %v204, 24
      %v327 = vpop.permute.xlu0 %326
      %328 = vrot.lane.b32.xlu0 %v205, 24
      %v329 = vpop.permute.xlu0 %328
      %330 = vrot.lane.b32.xlu0 %v206, 24
      %v331 = vpop.permute.xlu0 %330
      %332 = vrot.lane.b32.xlu0 %v207, 24
      %v333 = vpop.permute.xlu0 %332
      %334 = vrot.lane.b32.xlu0 %v208, 24
      %v335 = vpop.permute.xlu0 %334
      %336 = vrot.lane.b32.xlu0 %v209, 24
      %v337 = vpop.permute.xlu0 %336
      %354 = vrot.lane.b32.xlu0 %v210, 32
      %v355 = vpop.permute.xlu0 %354
      %356 = vrot.lane.b32.xlu0 %v211, 32
      %v357 = vpop.permute.xlu0 %356
      %358 = vrot.lane.b32.xlu0 %v212, 32
      %v359 = vpop.permute.xlu0 %358
      %360 = vrot.lane.b32.xlu0 %v213, 32
      %v361 = vpop.permute.xlu0 %360
      %362 = vrot.lane.b32.xlu0 %v214, 32
      %v363 = vpop.permute.xlu0 %362
      %364 = vrot.lane.b32.xlu0 %v215, 32
      %v365 = vpop.permute.xlu0 %364
      %366 = vrot.lane.b32.xlu0 %v216, 32
      %v367 = vpop.permute.xlu0 %366
      %368 = vrot.lane.b32.xlu0 %v217, 32
      %v369 = vpop.permute.xlu0 %368
      %vm378 = vcmask 64512
      %v379 = vsel %vm378, %v165, %v227
      %v380 = vsel %vm378, %v166, %v229
      %v381 = vsel %vm378, %v167, %v231
      %v382 = vsel %vm378, %v168, %v233
      %v383 = vsel %vm378, %v169, %v235
      %v384 = vsel %vm378, %v170, %v237
      %v385 = vsel %vm378, %v171, %v239
      %v386 = vsel %vm378, %v172, %v241
      %vm387 = vcmask 97280
      %v388 = vsel %vm387, %v379, %v259
      %v389 = vsel %vm387, %v380, %v261
      %v390 = vsel %vm387, %v381, %v263
      %v391 = vsel %vm387, %v382, %v265
      %v392 = vsel %vm387, %v383, %v267
      %v393 = vsel %vm387, %v384, %v269
      %v394 = vsel %vm387, %v385, %v271
      %v395 = vsel %vm387, %v386, %v273
      %vm396 = vcmask 130048
      %v397 = vsel %vm396, %v388, %v259
      %v398 = vsel %vm396, %v389, %v261
      %v399 = vsel %vm396, %v390, %v263
      %v400 = vsel %vm396, %v391, %v265
      %v401 = vsel %vm396, %v392, %v267
      %v402 = vsel %vm396, %v393, %v269
      %v403 = vsel %vm396, %v394, %v271
      %v404 = vsel %vm396, %v395, %v273
      %vm405 = vcmask 162816
      %v406 = vsel %vm405, %v397, %v291
      %v407 = vsel %vm405, %v398, %v293
      %v408 = vsel %vm405, %v399, %v295
      %v409 = vsel %vm405, %v400, %v297
      %v410 = vsel %vm405, %v401, %v299
      %v411 = vsel %vm405, %v402, %v301
      %v412 = vsel %vm405, %v403, %v303
      %v413 = vsel %vm405, %v404, %v305
      %vm414 = vcmask 195584
      %v415 = vsel %vm414, %v406, %v323
      %v416 = vsel %vm414, %v407, %v325
      %v417 = vsel %vm414, %v408, %v327
      %v418 = vsel %vm414, %v409, %v329
      %v419 = vsel %vm414, %v410, %v331
      %v420 = vsel %vm414, %v411, %v333
      %v421 = vsel %vm414, %v412, %v335
      %v422 = vsel %vm414, %v413, %v337
      %vm423 = vcmask 228352
      %v424 = vsel %vm423, %v415, %v323
      %v425 = vsel %vm423, %v416, %v325
      %v426 = vsel %vm423, %v417, %v327
      %v427 = vsel %vm423, %v418, %v329
      %v428 = vsel %vm423, %v419, %v331
      %v429 = vsel %vm423, %v420, %v333
      %v430 = vsel %vm423, %v421, %v335
      %v431 = vsel %vm423, %v422, %v337
      %vm432 = vcmask 261120
      %v433 = vsel %vm432, %v424, %v355
      %v434 = vsel %vm432, %v425, %v357
      %v435 = vsel %vm432, %v426, %v359
      %v436 = vsel %vm432, %v427, %v361
      %v437 = vsel %vm432, %v428, %v363
      %v438 = vsel %vm432, %v429, %v365
      %v439 = vsel %vm432, %v430, %v367
      %v440 = vsel %vm432, %v431, %v369
      %v441 = vld [vmem:[%s1] sm:$0xff]
      %vm442 = vcmask 293888
      %v444 = vsel %vm442, %v441, 0
      %v447 = vsel %vm442, %v433, 0
      %v450 = vsel %vm442, %v434, 0
      %v453 = vsel %vm442, %v435, 0
      %v456 = vsel %vm442, %v436, 0
      %v459 = vsel %vm442, %v437, 0
      %v462 = vsel %vm442, %v438, 0
      %v465 = vsel %vm442, %v439, 0
      %v468 = vsel %vm442, %v440, 0
      %470 = vmatpush.xpose.msra.mxu0 0.0
      %471 = vmatpush.xpose.msra.mxu0 0.0
      %472 = vmatpush.xpose.msra.mxu0 0.0
      %473 = vmatpush.xpose.msra.mxu0 0.0
      %474 = vmatpush.xpose.msra.mxu0 0.0
      %475 = vmatpush.xpose.msra.mxu0 0.0
      %476 = vmatpush.xpose.msra.mxu0 0.0
      %477 = vmatpush.xpose.msra.mxu0 0.0
      %478 = vmatpush.xpose.msra.mxu0 %v468
      %479 = vmatpush.xpose.msra.mxu0 %v465
      %480 = vmatpush.xpose.msra.mxu0 %v462
      %481 = vmatpush.xpose.msra.mxu0 %v459
      %482 = vmatpush.xpose.msra.mxu0 %v456
      %483 = vmatpush.xpose.msra.mxu0 %v453
      %484 = vmatpush.xpose.msra.mxu0 %v450
      %485 = vmatpush.xpose.msra.mxu0 %v447
      %486 = vmatmul.f32.gmra.mxu0 %v444
      %v487 = vpop.f32.mrf.mxu0
      %v488 = vadd.f32 0.0, %v487
      %489 = vdwg.mxu0
      %vm490 = vcmask 523264
      %491 = vst.msk [vmem:[%s161] sm:$0xff] %vm490, %v488
      %p492 = scmp.lt.s32.totalorder %s17, 1
      %s493 = scalar_select %p492, %s17, 1
      %p494 = scmp.lt.s32.totalorder %s18, 0
      %s495 = scalar_select %p494, %s18, 0
      %s496 = sadd.s32 %s495, %s493
      %s497 = smul.addr %s496, 8
      %s498 = scalar_lea.vmem %s2, %s497
      // Predicated region
      $region29: #{_downsampling_conv_impl.1} parent=27 // pred_check
        %p499 = pneg %p92
      $region30: #{_downsampling_conv_impl.1} parent=27 // pred_check_branch
        %501 = sbr.rel (%p499) target = $region32
      $region31: #{_downsampling_conv_impl.1} parent=27 // pred_region
        _
      $region32: #{_downsampling_conv_impl.1} parent=27 // pred_fallthru
        _
    $region28: #{_downsampling_conv_impl.1} parent=5 // pred_fallthru
      _
    %p502 = scmp.le.s32.totalorder 2, %s8
    // Predicated region
    $region33: #{_downsampling_conv_impl.1} parent=5 // pred_check
      %p503 = pneg %p502
    $region34: #{_downsampling_conv_impl.1} parent=5 // pred_check_branch
      %505 = sbr.rel (%p503) target = $region36
    $region35: #{_downsampling_conv_impl.1} parent=5 // pred_region
      %s506 = ssub.s32 %s8, 2
      // Predicated region
      $region37: #{_downsampling_conv_impl.1} parent=35 // pred_check
        %p507 = pneg %p98
      $region38: #{_downsampling_conv_impl.1} parent=35 // pred_check_branch
        %509 = sbr.rel (%p507) target = $region40
      $region39: #{_downsampling_conv_impl.1} parent=35 // pred_region
        %p510 = scmp.lt.s32.totalorder %s19, 1
        %s511 = scalar_select %p510, %s19, 1
        %p512 = scmp.lt.s32.totalorder %s20, 0
        %s513 = scalar_select %p512, %s20, 0
        %s514 = sadd.s32 %s513, %s511
        %s515 = smul.addr %s514, 8
        %s516 = scalar_lea.vmem %s2, %s515
      $region40: #{_downsampling_conv_impl.1} parent=35 // pred_fallthru
        _
    $region36: #{_downsampling_conv_impl.1} parent=5 // pred_fallthru
      _
  $region6: #{_downsampling_conv_impl.1} parent=0 // loop_footer
    %s12 = sadd.s32 1, %s8
  $region7: #{_downsampling_conv_impl.1} parent=0 // loop_footer_branch
    %7 = sbr.rel target = $region3
  $region8: #{_downsampling_conv_impl.1} parent=0 // loop_exit
    _

</llo_original>
